<compile_context>
chip_gen: v7x
topology: tpu7x:2x2x1
jax: 0.10.0
libtpu: 0.0.40
codegen_flags: <defaults>
</compile_context>

<pallas_src>
import jax
import jax.numpy as jnp
from jax.experimental import pallas as pl
from jax.experimental.pallas import tpu as pltpu

# ---------------------------------------------------------------------------
# Problem sizes (implied by the torch module) and padded kernel shapes
# ---------------------------------------------------------------------------
C_IN, H_IN, W_IN = 3, 11, 7
OC, KH, KW = 8, 3, 3
OH, OW = H_IN - KH + 1, W_IN - KW + 1            # 9, 5
FLAT = OC * OH * OW                              # 360
N1, N2, NQ = 64, 32, 3

K_REAL = C_IN * H_IN * W_IN                      # 231 flattened input features
BIAS_LANE = K_REAL                               # lane 231 of x holds constant 1.0
K0_PAD = 256                                     # 232 -> 256 (lane dense)
F_PAD = 384                                      # 360 -> 384 (3 * 128)
N_PAD = 128                                      # 64 / 32 / 3 -> 128 lanes
CONST_F = F_PAD - 1                              # lane 383 carries constant 1 after L0
CONST_N = N_PAD - 1                              # lane 127 carries constant 1 after L1/L2


# ---------------------------------------------------------------------------
# Fused Pallas kernel: conv(as matmul) + 3x Linear, biases folded into weights
# ---------------------------------------------------------------------------
def net_kernel(x_ref, wc_ref, w1_ref, w2q_ref, out_ref):
    # x   : [TM, 256]   (lanes 0..230 = flattened input, lane 231 = 1.0)
    # wc  : [256, 384]  conv-as-dense + conv-bias row + const-propagation column
    # w1  : [384, 128]  linear1.T + bias row + const-propagation column
    # w2q : [128, 256]  [:, :128] = linear2 (+bias/const), [:, 128:] = Q head (+bias)
    h = jnp.maximum(jnp.dot(x_ref[...], wc_ref[...],
                            preferred_element_type=jnp.float32), 0.0)
    h = jnp.maximum(jnp.dot(h, w1_ref[...],
                            preferred_element_type=jnp.float32), 0.0)
    h = jnp.maximum(jnp.dot(h, w2q_ref[:, :N_PAD],
                            preferred_element_type=jnp.float32), 0.0)
    out_ref[...] = jnp.dot(h, w2q_ref[:, N_PAD:],
                           preferred_element_type=jnp.float32)


# ---------------------------------------------------------------------------
# One-time parameter preparation: fold conv->matmul, fold flatten, fold biases
# ---------------------------------------------------------------------------
def prepare_params(params):
    """Transform torch-shaped params into 3 padded, fused weight slabs (done once)."""
    w_conv, b_conv, w1, b1, w2, b2, wq, bq = params

    # Conv-as-dense-matmul weight with columns in PyTorch Flatten order
    # (oc*45 + oh*5 + ow):  Wmat[c*77+h*7+w, oc*45+oh*5+ow] = w_conv[oc,c,h-oh,w-ow]
    Mh = (jnp.arange(H_IN)[None, :, None]
          == jnp.arange(OH)[None, None, :]
          + jnp.arange(KH)[:, None, None]).astype(jnp.float32)        # [KH, H, OH]
    Mw = (jnp.arange(W_IN)[None, :, None]
          == jnp.arange(OW)[None, None, :]
          + jnp.arange(KW)[:, None, None]).astype(jnp.float32)        # [KW, W, OW]
    wmat = jnp.einsum('acij,ihp,jwq->chwapq', w_conv, Mh, Mw).reshape(K_REAL, FLAT)
    bmat = jnp.repeat(b_conv, OH * OW)                                # [360], oc-major

    # NOTE: for v5e/v6e a bf16 cast of these slabs (keeping f32 accumulation in
    # the kernel) halves the per-call weight DMA; kept f32 here for exactness.

    # Layer 0: conv + bias; output lane 383 carries the constant 1.
    wc = jnp.zeros((K0_PAD, F_PAD), jnp.float32)
    wc = wc.at[:K_REAL, :FLAT].set(wmat)
    wc = wc.at[BIAS_LANE, :FLAT].set(bmat)         # bias row, consumed by x lane 231
    wc = wc.at[BIAS_LANE, CONST_F].set(1.0)        # propagate constant 1 (ReLU(1)=1)

    # Layer 1: linear1 + bias; output lane 127 carries the constant 1.
    w1p = jnp.zeros((F_PAD, N_PAD), jnp.float32)
    w1p = w1p.at[:FLAT, :N1].set(w1.T)
    w1p = w1p.at[CONST_F, :N1].set(b1)
    w1p = w1p.at[CONST_F, CONST_N].set(1.0)

    # Layers 2 + Q coalesced into one slab (one DMA instead of two).
    w2q = jnp.zeros((N_PAD, 2 * N_PAD), jnp.float32)
    w2q = w2q.at[:N1, :N2].set(w2.T)               # linear2
    w2q = w2q.at[CONST_N, :N2].set(b2)
    w2q = w2q.at[CONST_N, CONST_N].set(1.0)        # keep constant alive for Q's bias
    w2q = w2q.at[:N2, N_PAD:N_PAD + NQ].set(wq.T)  # Q head
    w2q = w2q.at[CONST_N, N_PAD:N_PAD + NQ].set(bq)
    return (wc, w1p, w2q)


# ---------------------------------------------------------------------------
# Forward
# ---------------------------------------------------------------------------
def _round_up(n, m):
    return (n + m - 1) // m * m


@jax.jit
def net_forward(x, prepped):
    """x: [B, 3, 11, 7] float32 (NCHW) -> [B, 3] float32."""
    wc, w1p, w2q = prepped
    bsz = x.shape[0]
    tm = 8 if bsz <= 8 else 128                    # tiny-batch latency vs throughput
    m_total = _round_up(bsz, tm)
    grid = (m_total // tm,)

    # Single small prep fusion: flatten, append the constant-1 bias lane, pad.
    x_flat = x.reshape(bsz, K_REAL)
    x_aug = jnp.concatenate([x_flat, jnp.ones((bsz, 1), jnp.float32)], axis=1)
    x_pad = jnp.pad(x_aug, ((0, m_total - bsz), (0, K0_PAD - (K_REAL + 1))))

    cost = pl.CostEstimate(
        flops=2 * m_total * (K0_PAD * F_PAD + F_PAD * N_PAD + 2 * N_PAD * N_PAD),
        transcendentals=0,
        bytes_accessed=4 * (m_total * K0_PAD + K0_PAD * F_PAD + F_PAD * N_PAD
                            + N_PAD * 2 * N_PAD + m_total * N_PAD),
    )

    out = pl.pallas_call(
        net_kernel,
        out_shape=jax.ShapeDtypeStruct((m_total, N_PAD), jnp.float32),
        grid=grid,
        in_specs=[
            pl.BlockSpec((tm, K0_PAD), lambda i: (i, 0)),        # x: tiled over batch
            pl.BlockSpec((K0_PAD, F_PAD), lambda i: (0, 0)),     # weights: resident
            pl.BlockSpec((F_PAD, N_PAD), lambda i: (0, 0)),
            pl.BlockSpec((N_PAD, 2 * N_PAD), lambda i: (0, 0)),
        ],
        out_specs=pl.BlockSpec((tm, N_PAD), lambda i: (i, 0)),
        compiler_params=pltpu.CompilerParams(
            dimension_semantics=("parallel",)),                  # both TCs on v7x
        cost_estimate=cost,
    )(x_pad, wc, w1p, w2q)
    return out[:bsz, :NQ]


# ---------------------------------------------------------------------------
# Deterministic init with the same shapes as the torch module
# ---------------------------------------------------------------------------
def init_params(key):
    ks = jax.random.split(key, 8)

    def uinit(k, shape, fan_in):
        bound = 1.0 / jnp.sqrt(fan_in)
        return jax.random.uniform(k, shape, jnp.float32, -bound, bound)

    w_conv = uinit(ks[0], (OC, C_IN, KH, KW), C_IN * KH * KW)   # Conv2d(3, 8, 3)
    b_conv = uinit(ks[1], (OC,), C_IN * KH * KW)
    w1 = uinit(ks[2], (N1, FLAT), FLAT)                         # Linear(360, 64)
    b1 = uinit(ks[3], (N1,), FLAT)
    w2 = uinit(ks[4], (N2, N1), N1)                             # Linear(64, 32)
    b2 = uinit(ks[5], (N2,), N1)
    wq = uinit(ks[6], (NQ, N2), N2)                             # Linear(32, 3)
    bq = uinit(ks[7], (NQ,), N2)
    return (w_conv, b_conv, w1, b1, w2, b2, wq, bq)


def _reference(x, params):
    """Pure-JAX reference matching the PyTorch forward."""
    w_conv, b_conv, w1, b1, w2, b2, wq, bq = params
    h = jax.lax.conv_general_dilated(
        x, w_conv, window_strides=(1, 1), padding="VALID",
        dimension_numbers=("NCHW", "OIHW", "NCHW")) + b_conv[None, :, None, None]
    h = jnp.maximum(h, 0.0).reshape(x.shape[0], -1)     # PyTorch Flatten (channel-major)
    h = jnp.maximum(h @ w1.T + b1, 0.0)
    h = jnp.maximum(h @ w2.T + b2, 0.0)
    return h @ wq.T + bq


if __name__ == "__main__":
    key = jax.random.PRNGKey(0)
    k_x, k_xb, k_p = jax.random.split(key, 3)

    params = init_params(k_p)
    prepped = prepare_params(params)          # one-time weight fusion / padding

    # Small-batch (latency) path: B=2 -> single 8-row tile, grid=(1,).
    bsz = 2
    x = jax.random.normal(k_x, (bsz, C_IN, H_IN, W_IN), dtype=jnp.float32)
    out = jax.block_until_ready(net_forward(x, prepped))
    assert out.shape == (bsz, NQ) and out.dtype == jnp.float32
    ref = _reference(x, params)
    assert jnp.allclose(out, ref, atol=1e-3, rtol=1e-3), (
        f"max abs err {jnp.max(jnp.abs(out - ref))}")

    # Batched (throughput) path: B=200 -> 128-row tiles, grid=(2,), parallel axis.
    bsz_big = 200
    xb = jax.random.normal(k_xb, (bsz_big, C_IN, H_IN, W_IN), dtype=jnp.float32)
    out_b = jax.block_until_ready(net_forward(xb, prepped))
    assert out_b.shape == (bsz_big, NQ)
    ref_b = _reference(xb, params)
    assert jnp.allclose(out_b, ref_b, atol=1e-3, rtol=1e-3), (
        f"max abs err {jnp.max(jnp.abs(out_b - ref_b))}")

    print("KERNEL_OK")
</pallas_src>

<mosaic_0001>
module attributes {stable_mosaic.version = 11 : i64} {
  func.func @net_kernel(%arg0: i32, %arg1: memref<8x256xf32, #tpu.memory_space<vmem>>, %arg2: memref<256x384xf32, #tpu.memory_space<vmem>>, %arg3: memref<384x128xf32, #tpu.memory_space<vmem>>, %arg4: memref<128x256xf32, #tpu.memory_space<vmem>>, %arg5: memref<8x128xf32, #tpu.memory_space<vmem>>) attributes {dimension_semantics = [#tpu.dimension_semantics<parallel>], iteration_bounds = array<i64: 1>, scalar_prefetch = 0 : i64, scratch_operands = 0 : i64, tpu.core_type = #tpu.core_type<tc>, window_params = [{transform_indices = @transform_0, window_bounds = array<i64: 8, 256>}, {pipeline_mode = #tpu.pipeline_mode<synchronous>, transform_indices = @transform_1, window_bounds = array<i64: 256, 384>}, {pipeline_mode = #tpu.pipeline_mode<synchronous>, transform_indices = @transform_2, window_bounds = array<i64: 384, 128>}, {pipeline_mode = #tpu.pipeline_mode<synchronous>, transform_indices = @transform_3, window_bounds = array<i64: 128, 256>}, {transform_indices = @transform_4, window_bounds = array<i64: 8, 128>}]} {
    %c0 = arith.constant 0 : index
    %c0_0 = arith.constant 0 : index
    %0 = vector.load %arg1[%c0, %c0_0] : memref<8x256xf32, #tpu.memory_space<vmem>>, vector<8x256xf32>
    %c0_1 = arith.constant 0 : index
    %c0_2 = arith.constant 0 : index
    %1 = vector.load %arg2[%c0_1, %c0_2] : memref<256x384xf32, #tpu.memory_space<vmem>>, vector<256x384xf32>
    %cst = arith.constant dense<0.000000e+00> : vector<8x384xf32>
    %2 = tpu.matmul %0, %1, %cst {dimension_numbers = #tpu.dot_dimension_numbers<[1], [0], [0], [1], [0, 0, 1, 1], [], []>} : vector<8x256xf32>, vector<256x384xf32>, vector<8x384xf32> -> vector<8x384xf32>
    %cst_3 = arith.constant 0.000000e+00 : f32
    %3 = vector.broadcast %cst_3 : f32 to vector<8x384xf32>
    %4 = arith.maximumf %2, %3 : vector<8x384xf32>
    %c0_4 = arith.constant 0 : index
    %c0_5 = arith.constant 0 : index
    %5 = vector.load %arg3[%c0_4, %c0_5] : memref<384x128xf32, #tpu.memory_space<vmem>>, vector<384x128xf32>
    %cst_6 = arith.constant dense<0.000000e+00> : vector<8x128xf32>
    %6 = tpu.matmul %4, %5, %cst_6 {dimension_numbers = #tpu.dot_dimension_numbers<[1], [0], [0], [1], [0, 0, 1, 1], [], []>} : vector<8x384xf32>, vector<384x128xf32>, vector<8x128xf32> -> vector<8x128xf32>
    %cst_7 = arith.constant 0.000000e+00 : f32
    %7 = vector.broadcast %cst_7 : f32 to vector<8x128xf32>
    %8 = arith.maximumf %6, %7 : vector<8x128xf32>
    %c0_8 = arith.constant 0 : index
    %c0_9 = arith.constant 0 : index
    %9 = vector.load %arg4[%c0_8, %c0_9] : memref<128x256xf32, #tpu.memory_space<vmem>>, vector<128x128xf32>
    %cst_10 = arith.constant dense<0.000000e+00> : vector<8x128xf32>
    %10 = tpu.matmul %8, %9, %cst_10 {dimension_numbers = #tpu.dot_dimension_numbers<[1], [0], [0], [1], [0, 0, 1, 1], [], []>} : vector<8x128xf32>, vector<128x128xf32>, vector<8x128xf32> -> vector<8x128xf32>
    %cst_11 = arith.constant 0.000000e+00 : f32
    %11 = vector.broadcast %cst_11 : f32 to vector<8x128xf32>
    %12 = arith.maximumf %10, %11 : vector<8x128xf32>
    %c0_12 = arith.constant 0 : index
    %c128 = arith.constant 128 : index
    %13 = vector.load %arg4[%c0_12, %c128] : memref<128x256xf32, #tpu.memory_space<vmem>>, vector<128x128xf32>
    %cst_13 = arith.constant dense<0.000000e+00> : vector<8x128xf32>
    %14 = tpu.matmul %12, %13, %cst_13 {dimension_numbers = #tpu.dot_dimension_numbers<[1], [0], [0], [1], [0, 0, 1, 1], [], []>} : vector<8x128xf32>, vector<128x128xf32>, vector<8x128xf32> -> vector<8x128xf32>
    %c0_14 = arith.constant 0 : index
    %c0_15 = arith.constant 0 : index
    %15 = vector.load %arg5[%c0_14, %c0_15] : memref<8x128xf32, #tpu.memory_space<vmem>>, vector<8x128xf32>
    tpu.vector_store %arg5[%c0_14, %c0_15], %14 {strides = array<i32>} : memref<8x128xf32, #tpu.memory_space<vmem>>, vector<8x128xf32>,
    return
  }
  func.func @transform_0(%arg0: i32) -> (i32, i32) {
    %c0_i32 = arith.constant 0 : i32
    %c0_i32_0 = arith.constant 0 : i32
    return %arg0, %c0_i32 : i32, i32
  }
  func.func @transform_1(%arg0: i32) -> (i32, i32) {
    %c0_i32 = arith.constant 0 : i32
    %c0_i32_0 = arith.constant 0 : i32
    %c0_i32_1 = arith.constant 0 : i32
    return %c0_i32, %c0_i32_0 : i32, i32
  }
  func.func @transform_2(%arg0: i32) -> (i32, i32) {
    %c0_i32 = arith.constant 0 : i32
    %c0_i32_0 = arith.constant 0 : i32
    %c0_i32_1 = arith.constant 0 : i32
    return %c0_i32, %c0_i32_0 : i32, i32
  }
  func.func @transform_3(%arg0: i32) -> (i32, i32) {
    %c0_i32 = arith.constant 0 : i32
    %c0_i32_0 = arith.constant 0 : i32
    %c0_i32_1 = arith.constant 0 : i32
    return %c0_i32, %c0_i32_0 : i32, i32
  }
  func.func @transform_4(%arg0: i32) -> (i32, i32) {
    %c0_i32 = arith.constant 0 : i32
    %c0_i32_0 = arith.constant 0 : i32
    return %arg0, %c0_i32 : i32, i32
  }
}

</mosaic_0001>

<llo_original>
// kernel: net_forward.1
$region0: #{net_forward.1}
  #allocation0 [shape = 'u32[]', space=smem, size = 0x4, offset = 0x4, fixed_abs, tag = 'smem constant byte address 0x4 - core index']
  #allocation1 [shape = 'u32[144,128]{1,0:T(1,128)}', space=vmem, size = 0x12000, scoped, tag = 'internal scratch']
  %s0 = inlined_call_operand.vmem [shape: f32[8,256], index: 0, kind: input, shape index: {}]
  %s1 = inlined_call_operand.hbm [shape: f32[256,384], index: 1, kind: input, shape index: {}]
  %s2 = inlined_call_operand.hbm [shape: f32[384,128], index: 2, kind: input, shape index: {}]
  %s3 = inlined_call_operand.vmem [shape: f32[128,256], index: 3, kind: input, shape index: {}]
  %s4 = inlined_call_operand.vmem [shape: f32[8,128], index: 4, kind: output, shape index: {}]
  %s5 = sld [smem:[#allocation0]]
  $region34: #{net_forward.1} parent=0
    _
  %s7 = ssub.s32 1, %s5
  %s8 = scalar_select 0, %s7, %s5
  $region1: #{net_forward.1} parent=0
    #allocation2 [shape = 'u8[393216]{0}', space=vmem, size = 0x60000, scoped, tag = 'input window, operand 1, single buffered']
    #allocation3 [shape = 's32[1]{0}', space=sflag, size = 0x4, scoped, tag = 'scoped memory for net_forward.1']
    #allocation4 [shape = 'u8[196608]{0}', space=vmem, size = 0x30000, scoped, tag = 'input window, operand 2, single buffered']
    #allocation5 [shape = 's32[1]{0}', space=sflag, size = 0x4, scoped, tag = 'scoped memory for net_forward.1']
    %9 = vsyncpa [#allocation3], 0
    %10 = vsyncpa [#allocation5], 0
    // Predicated region
    $region2: #{net_forward.1} parent=1 // pred_check
      _
    $region3: #{net_forward.1} parent=1 // pred_check_branch
      %12 = sbr.rel (0) target = $region5
    $region4: #{net_forward.1} parent=1 // pred_region
      _
    $region5: #{net_forward.1} parent=1 // pred_fallthru
      _
    // Predicated region
    $region6: #{net_forward.1} parent=1 // pred_check
      _
    $region7: #{net_forward.1} parent=1 // pred_check_branch
      %14 = sbr.rel (0) target = $region9
    $region8: #{net_forward.1} parent=1 // pred_region
      %s16 = ssub.s32 12288, 12288
      %17 = vsyncadd [#allocation3], %s16
      %s18 = sshll.u32 [#allocation2], 4
      %s19 = int_to_ptr.vmem [resolvable:$true] %s18
      %24 = dma.hbm_to_vmem [thread:$0]  %s1, 12288, %s19, [#allocation3], 384, 384, 24
    $region9: #{net_forward.1} parent=1 // pred_fallthru
      _
    // Predicated region
    $region10: #{net_forward.1} parent=1 // pred_check
      _
    $region11: #{net_forward.1} parent=1 // pred_check_branch
      %26 = sbr.rel (0) target = $region13
    $region12: #{net_forward.1} parent=1 // pred_region
      %s28 = ssub.s32 6144, 6144
      %29 = vsyncadd [#allocation5], %s28
      %s30 = sshll.u32 [#allocation4], 4
      %s31 = int_to_ptr.vmem [resolvable:$true] %s30
      %36 = dma.hbm_to_vmem [thread:$0]  %s2, 6144, %s31, [#allocation5], 128, 128, 8
    $region13: #{net_forward.1} parent=1 // pred_fallthru
      _
    // Predicated region
    $region14: #{net_forward.1} parent=1 // pred_check
      _
    $region15: #{net_forward.1} parent=1 // pred_check_branch
      %38 = sbr.rel (0) target = $region17
    $region16: #{net_forward.1} parent=1 // pred_region
      _
    $region17: #{net_forward.1} parent=1 // pred_fallthru
      _
    // Predicated region
    $region18: #{net_forward.1} parent=1 // pred_check
      _
    $region19: #{net_forward.1} parent=1 // pred_check_branch
      %40 = sbr.rel (0) target = $region21
    $region20: #{net_forward.1} parent=1 // pred_region
      %41 = dma.done [#allocation3], 12288
    $region21: #{net_forward.1} parent=1 // pred_fallthru
      _
    // Predicated region
    $region22: #{net_forward.1} parent=1 // pred_check
      _
    $region23: #{net_forward.1} parent=1 // pred_check_branch
      %43 = sbr.rel (0) target = $region25
    $region24: #{net_forward.1} parent=1 // pred_region
      %44 = dma.done [#allocation5], 6144
    $region25: #{net_forward.1} parent=1 // pred_fallthru
      _
    %v45 = vld [vmem:[%s0] sm:$0xff]
    %v46 = vld [vmem:[%s0 + $0x8] sm:$0xff]
    %v47 = vld [vmem:[#allocation2] sm:$0xff]
    %v48 = vld [vmem:[#allocation2 + $0x8] sm:$0xff]
    %v49 = vld [vmem:[#allocation2 + $0x10] sm:$0xff]
    %v50 = vld [vmem:[#allocation2 + $0x18] sm:$0xff]
    %v51 = vld [vmem:[#allocation2 + $0x20] sm:$0xff]
    %v52 = vld [vmem:[#allocation2 + $0x28] sm:$0xff]
    %v53 = vld [vmem:[#allocation2 + $0x30] sm:$0xff]
    %v54 = vld [vmem:[#allocation2 + $0x38] sm:$0xff]
    %v55 = vld [vmem:[#allocation2 + $0x40] sm:$0xff]
    %v56 = vld [vmem:[#allocation2 + $0x48] sm:$0xff]
    %v57 = vld [vmem:[#allocation2 + $0x50] sm:$0xff]
    %v58 = vld [vmem:[#allocation2 + $0x58] sm:$0xff]
    %v59 = vld [vmem:[#allocation2 + $0x60] sm:$0xff]
    %v60 = vld [vmem:[#allocation2 + $0x68] sm:$0xff]
    %v61 = vld [vmem:[#allocation2 + $0x70] sm:$0xff]
    %v62 = vld [vmem:[#allocation2 + $0x78] sm:$0xff]
    %v63 = vld [vmem:[#allocation2 + $0x80] sm:$0xff]
    %v64 = vld [vmem:[#allocation2 + $0x88] sm:$0xff]
    %v65 = vld [vmem:[#allocation2 + $0x90] sm:$0xff]
    %v66 = vld [vmem:[#allocation2 + $0x98] sm:$0xff]
    %v67 = vld [vmem:[#allocation2 + $0xa0] sm:$0xff]
    %v68 = vld [vmem:[#allocation2 + $0xa8] sm:$0xff]
    %v69 = vld [vmem:[#allocation2 + $0xb0] sm:$0xff]
    %v70 = vld [vmem:[#allocation2 + $0xb8] sm:$0xff]
    %v71 = vld [vmem:[#allocation2 + $0xc0] sm:$0xff]
    %v72 = vld [vmem:[#allocation2 + $0xc8] sm:$0xff]
    %v73 = vld [vmem:[#allocation2 + $0xd0] sm:$0xff]
    %v74 = vld [vmem:[#allocation2 + $0xd8] sm:$0xff]
    %v75 = vld [vmem:[#allocation2 + $0xe0] sm:$0xff]
    %v76 = vld [vmem:[#allocation2 + $0xe8] sm:$0xff]
    %v77 = vld [vmem:[#allocation2 + $0xf0] sm:$0xff]
    %v78 = vld [vmem:[#allocation2 + $0xf8] sm:$0xff]
    %v79 = vld [vmem:[#allocation2 + $0x100] sm:$0xff]
    %v80 = vld [vmem:[#allocation2 + $0x108] sm:$0xff]
    %v81 = vld [vmem:[#allocation2 + $0x110] sm:$0xff]
    %v82 = vld [vmem:[#allocation2 + $0x118] sm:$0xff]
    %v83 = vld [vmem:[#allocation2 + $0x120] sm:$0xff]
    %v84 = vld [vmem:[#allocation2 + $0x128] sm:$0xff]
    %v85 = vld [vmem:[#allocation2 + $0x130] sm:$0xff]
    %v86 = vld [vmem:[#allocation2 + $0x138] sm:$0xff]
    %v87 = vld [vmem:[#allocation2 + $0x140] sm:$0xff]
    %v88 = vld [vmem:[#allocation2 + $0x148] sm:$0xff]
    %v89 = vld [vmem:[#allocation2 + $0x150] sm:$0xff]
    %v90 = vld [vmem:[#allocation2 + $0x158] sm:$0xff]
    %v91 = vld [vmem:[#allocation2 + $0x160] sm:$0xff]
    %v92 = vld [vmem:[#allocation2 + $0x168] sm:$0xff]
    %v93 = vld [vmem:[#allocation2 + $0x170] sm:$0xff]
    %v94 = vld [vmem:[#allocation2 + $0x178] sm:$0xff]
    %v95 = vld [vmem:[#allocation2 + $0x180] sm:$0xff]
    %v96 = vld [vmem:[#allocation2 + $0x188] sm:$0xff]
    %v97 = vld [vmem:[#allocation2 + $0x190] sm:$0xff]
    %v98 = vld [vmem:[#allocation2 + $0x198] sm:$0xff]
    %v99 = vld [vmem:[#allocation2 + $0x1a0] sm:$0xff]
    %v100 = vld [vmem:[#allocation2 + $0x1a8] sm:$0xff]
    %v101 = vld [vmem:[#allocation2 + $0x1b0] sm:$0xff]
    %v102 = vld [vmem:[#allocation2 + $0x1b8] sm:$0xff]
    %v103 = vld [vmem:[#allocation2 + $0x1c0] sm:$0xff]
    %v104 = vld [vmem:[#allocation2 + $0x1c8] sm:$0xff]
    %v105 = vld [vmem:[#allocation2 + $0x1d0] sm:$0xff]
    %v106 = vld [vmem:[#allocation2 + $0x1d8] sm:$0xff]
    %v107 = vld [vmem:[#allocation2 + $0x1e0] sm:$0xff]
    %v108 = vld [vmem:[#allocation2 + $0x1e8] sm:$0xff]
    %v109 = vld [vmem:[#allocation2 + $0x1f0] sm:$0xff]
    %v110 = vld [vmem:[#allocation2 + $0x1f8] sm:$0xff]
    %v111 = vld [vmem:[#allocation2 + $0x200] sm:$0xff]
    %v112 = vld [vmem:[#allocation2 + $0x208] sm:$0xff]
    %v113 = vld [vmem:[#allocation2 + $0x210] sm:$0xff]
    %v114 = vld [vmem:[#allocation2 + $0x218] sm:$0xff]
    %v115 = vld [vmem:[#allocation2 + $0x220] sm:$0xff]
    %v116 = vld [vmem:[#allocation2 + $0x228] sm:$0xff]
    %v117 = vld [vmem:[#allocation2 + $0x230] sm:$0xff]
    %v118 = vld [vmem:[#allocation2 + $0x238] sm:$0xff]
    %v119 = vld [vmem:[#allocation2 + $0x240] sm:$0xff]
    %v120 = vld [vmem:[#allocation2 + $0x248] sm:$0xff]
    %v121 = vld [vmem:[#allocation2 + $0x250] sm:$0xff]
    %v122 = vld [vmem:[#allocation2 + $0x258] sm:$0xff]
    %v123 = vld [vmem:[#allocation2 + $0x260] sm:$0xff]
    %v124 = vld [vmem:[#allocation2 + $0x268] sm:$0xff]
    %v125 = vld [vmem:[#allocation2 + $0x270] sm:$0xff]
    %v126 = vld [vmem:[#allocation2 + $0x278] sm:$0xff]
    %v127 = vld [vmem:[#allocation2 + $0x280] sm:$0xff]
    %v128 = vld [vmem:[#allocation2 + $0x288] sm:$0xff]
    %v129 = vld [vmem:[#allocation2 + $0x290] sm:$0xff]
    %v130 = vld [vmem:[#allocation2 + $0x298] sm:$0xff]
    %v131 = vld [vmem:[#allocation2 + $0x2a0] sm:$0xff]
    %v132 = vld [vmem:[#allocation2 + $0x2a8] sm:$0xff]
    %v133 = vld [vmem:[#allocation2 + $0x2b0] sm:$0xff]
    %v134 = vld [vmem:[#allocation2 + $0x2b8] sm:$0xff]
    %v135 = vld [vmem:[#allocation2 + $0x2c0] sm:$0xff]
    %v136 = vld [vmem:[#allocation2 + $0x2c8] sm:$0xff]
    %v137 = vld [vmem:[#allocation2 + $0x2d0] sm:$0xff]
    %v138 = vld [vmem:[#allocation2 + $0x2d8] sm:$0xff]
    %v139 = vld [vmem:[#allocation2 + $0x2e0] sm:$0xff]
    %v140 = vld [vmem:[#allocation2 + $0x2e8] sm:$0xff]
    %v141 = vld [vmem:[#allocation2 + $0x2f0] sm:$0xff]
    %v142 = vld [vmem:[#allocation2 + $0x2f8] sm:$0xff]
    %143 = vmatprep.subr.mxu0 %v48
    %144 = vmatpush1.msra.mxu0 %v47
    %145 = vmatprep.subr.mxu0 %v51
    %146 = vmatpush1.msra.mxu0 %v50
    %147 = vmatprep.subr.mxu0 %v54
    %148 = vmatpush1.msra.mxu0 %v53
    %149 = vmatprep.subr.mxu0 %v57
    %150 = vmatpush1.msra.mxu0 %v56
    %151 = vmatprep.subr.mxu0 %v60
    %152 = vmatpush1.msra.mxu0 %v59
    %153 = vmatprep.subr.mxu0 %v63
    %154 = vmatpush1.msra.mxu0 %v62
    %155 = vmatprep.subr.mxu0 %v66
    %156 = vmatpush1.msra.mxu0 %v65
    %157 = vmatprep.subr.mxu0 %v69
    %158 = vmatpush1.msra.mxu0 %v68
    %159 = vmatprep.subr.mxu0 %v72
    %160 = vmatpush1.msra.mxu0 %v71
    %161 = vmatprep.subr.mxu0 %v75
    %162 = vmatpush1.msra.mxu0 %v74
    %163 = vmatprep.subr.mxu0 %v78
    %164 = vmatpush1.msra.mxu0 %v77
    %165 = vmatprep.subr.mxu0 %v81
    %166 = vmatpush1.msra.mxu0 %v80
    %167 = vmatprep.subr.mxu0 %v84
    %168 = vmatpush1.msra.mxu0 %v83
    %169 = vmatprep.subr.mxu0 %v87
    %170 = vmatpush1.msra.mxu0 %v86
    %171 = vmatprep.subr.mxu0 %v90
    %172 = vmatpush1.msra.mxu0 %v89
    %173 = vmatprep.subr.mxu0 %v93
    %174 = vmatpush1.msra.mxu0 %v92
    %175 = vmatprep.subr.mxu0 %v96
    %176 = vmatpush1.msra.mxu0 %v95
    %177 = vmatprep.subr.mxu0 %v99
    %178 = vmatpush1.msra.mxu0 %v98
    %179 = vmatprep.subr.mxu0 %v102
    %180 = vmatpush1.msra.mxu0 %v101
    %181 = vmatprep.subr.mxu0 %v105
    %182 = vmatpush1.msra.mxu0 %v104
    %183 = vmatprep.subr.mxu0 %v108
    %184 = vmatpush1.msra.mxu0 %v107
    %185 = vmatprep.subr.mxu0 %v111
    %186 = vmatpush1.msra.mxu0 %v110
    %187 = vmatprep.subr.mxu0 %v114
    %188 = vmatpush1.msra.mxu0 %v113
    %189 = vmatprep.subr.mxu0 %v117
    %190 = vmatpush1.msra.mxu0 %v116
    %191 = vmatprep.subr.mxu0 %v120
    %192 = vmatpush1.msra.mxu0 %v119
    %193 = vmatprep.subr.mxu0 %v123
    %194 = vmatpush1.msra.mxu0 %v122
    %195 = vmatprep.subr.mxu0 %v126
    %196 = vmatpush1.msra.mxu0 %v125
    %197 = vmatprep.subr.mxu0 %v129
    %198 = vmatpush1.msra.mxu0 %v128
    %199 = vmatprep.subr.mxu0 %v132
    %200 = vmatpush1.msra.mxu0 %v131
    %201 = vmatprep.subr.mxu0 %v135
    %202 = vmatpush1.msra.mxu0 %v134
    %203 = vmatprep.subr.mxu0 %v138
    %204 = vmatpush1.msra.mxu0 %v137
    %205 = vmatprep.subr.mxu0 %v141
    %206 = vmatpush1.msra.mxu0 %v140
    %207 = vmatprep.mubr.f32.mxu0 %v46
    %208 = vmatmul.mubr.f32.gmra.mrb[0].mxu0 %v45
    %v209 = vpop.f32.mrb[0].mxu0
    %v210 = vadd.f32 0.0, %v209
    %v211 = vpop.f32.mrb[0].mxu0
    %v212 = vadd.f32 0.0, %v211
    %213 = vdwg.mxu0
    %214 = vmatprep.subr.mxu0 0.0
    %215 = vmatpush1.msra.mxu0 %v49
    %216 = vmatprep.subr.mxu0 0.0
    %217 = vmatpush1.msra.mxu0 %v52
    %218 = vmatprep.subr.mxu0 0.0
    %219 = vmatpush1.msra.mxu0 %v55
    %220 = vmatprep.subr.mxu0 0.0
    %221 = vmatpush1.msra.mxu0 %v58
    %222 = vmatprep.subr.mxu0 0.0
    %223 = vmatpush1.msra.mxu0 %v61
    %224 = vmatprep.subr.mxu0 0.0
    %225 = vmatpush1.msra.mxu0 %v64
    %226 = vmatprep.subr.mxu0 0.0
    %227 = vmatpush1.msra.mxu0 %v67
    %228 = vmatprep.subr.mxu0 0.0
    %229 = vmatpush1.msra.mxu0 %v70
    %230 = vmatprep.subr.mxu0 0.0
    %231 = vmatpush1.msra.mxu0 %v73
    %232 = vmatprep.subr.mxu0 0.0
    %233 = vmatpush1.msra.mxu0 %v76
    %234 = vmatprep.subr.mxu0 0.0
    %235 = vmatpush1.msra.mxu0 %v79
    %236 = vmatprep.subr.mxu0 0.0
    %237 = vmatpush1.msra.mxu0 %v82
    %238 = vmatprep.subr.mxu0 0.0
    %239 = vmatpush1.msra.mxu0 %v85
    %240 = vmatprep.subr.mxu0 0.0
    %241 = vmatpush1.msra.mxu0 %v88
    %242 = vmatprep.subr.mxu0 0.0
    %243 = vmatpush1.msra.mxu0 %v91
    %244 = vmatprep.subr.mxu0 0.0
    %245 = vmatpush1.msra.mxu0 %v94
    %246 = vmatprep.subr.mxu0 0.0
    %247 = vmatpush1.msra.mxu0 %v97
    %248 = vmatprep.subr.mxu0 0.0
    %249 = vmatpush1.msra.mxu0 %v100
    %250 = vmatprep.subr.mxu0 0.0
    %251 = vmatpush1.msra.mxu0 %v103
    %252 = vmatprep.subr.mxu0 0.0
    %253 = vmatpush1.msra.mxu0 %v106
    %254 = vmatprep.subr.mxu0 0.0
    %255 = vmatpush1.msra.mxu0 %v109
    %256 = vmatprep.subr.mxu0 0.0
    %257 = vmatpush1.msra.mxu0 %v112
    %258 = vmatprep.subr.mxu0 0.0
    %259 = vmatpush1.msra.mxu0 %v115
    %260 = vmatprep.subr.mxu0 0.0
    %261 = vmatpush1.msra.mxu0 %v118
    %262 = vmatprep.subr.mxu0 0.0
    %263 = vmatpush1.msra.mxu0 %v121
    %264 = vmatprep.subr.mxu0 0.0
    %265 = vmatpush1.msra.mxu0 %v124
    %266 = vmatprep.subr.mxu0 0.0
    %267 = vmatpush1.msra.mxu0 %v127
    %268 = vmatprep.subr.mxu0 0.0
    %269 = vmatpush1.msra.mxu0 %v130
    %270 = vmatprep.subr.mxu0 0.0
    %271 = vmatpush1.msra.mxu0 %v133
    %272 = vmatprep.subr.mxu0 0.0
    %273 = vmatpush1.msra.mxu0 %v136
    %274 = vmatprep.subr.mxu0 0.0
    %275 = vmatpush1.msra.mxu0 %v139
    %276 = vmatprep.subr.mxu0 0.0
    %277 = vmatpush1.msra.mxu0 %v142
    %278 = vmatprep.mubr.f32.mxu0 %v46
    %279 = vmatmul.mubr.f32.gmra.mrb[0].mxu0 %v45
    %v280 = vpop.f32.mrb[0].mxu0
    %v281 = vadd.f32 0.0, %v280
    %v282 = vpop.f32.mrb[0].mxu0
    %283 = vdwg.mxu0
    %v284 = vmax.f32 %v210, 0.0
    %v285 = vmax.f32 %v212, 0.0
    %v286 = vmax.f32 %v281, 0.0
    %v287 = vld [vmem:[#allocation4] sm:$0xff]
    %v288 = vld [vmem:[#allocation4 + $0x8] sm:$0xff]
    %v289 = vld [vmem:[#allocation4 + $0x10] sm:$0xff]
    %v290 = vld [vmem:[#allocation4 + $0x18] sm:$0xff]
    %v291 = vld [vmem:[#allocation4 + $0x20] sm:$0xff]
    %v292 = vld [vmem:[#allocation4 + $0x28] sm:$0xff]
    %v293 = vld [vmem:[#allocation4 + $0x30] sm:$0xff]
    %v294 = vld [vmem:[#allocation4 + $0x38] sm:$0xff]
    %v295 = vld [vmem:[#allocation4 + $0x40] sm:$0xff]
    %v296 = vld [vmem:[#allocation4 + $0x48] sm:$0xff]
    %v297 = vld [vmem:[#allocation4 + $0x50] sm:$0xff]
    %v298 = vld [vmem:[#allocation4 + $0x58] sm:$0xff]
    %v299 = vld [vmem:[#allocation4 + $0x60] sm:$0xff]
    %v300 = vld [vmem:[#allocation4 + $0x68] sm:$0xff]
    %v301 = vld [vmem:[#allocation4 + $0x70] sm:$0xff]
    %v302 = vld [vmem:[#allocation4 + $0x78] sm:$0xff]
    %v303 = vld [vmem:[#allocation4 + $0x80] sm:$0xff]
    %v304 = vld [vmem:[#allocation4 + $0x88] sm:$0xff]
    %v305 = vld [vmem:[#allocation4 + $0x90] sm:$0xff]
    %v306 = vld [vmem:[#allocation4 + $0x98] sm:$0xff]
    %v307 = vld [vmem:[#allocation4 + $0xa0] sm:$0xff]
    %v308 = vld [vmem:[#allocation4 + $0xa8] sm:$0xff]
    %v309 = vld [vmem:[#allocation4 + $0xb0] sm:$0xff]
    %v310 = vld [vmem:[#allocation4 + $0xb8] sm:$0xff]
    %v311 = vld [vmem:[#allocation4 + $0xc0] sm:$0xff]
    %v312 = vld [vmem:[#allocation4 + $0xc8] sm:$0xff]
    %v313 = vld [vmem:[#allocation4 + $0xd0] sm:$0xff]
    %v314 = vld [vmem:[#allocation4 + $0xd8] sm:$0xff]
    %v315 = vld [vmem:[#allocation4 + $0xe0] sm:$0xff]
    %v316 = vld [vmem:[#allocation4 + $0xe8] sm:$0xff]
    %v317 = vld [vmem:[#allocation4 + $0xf0] sm:$0xff]
    %v318 = vld [vmem:[#allocation4 + $0xf8] sm:$0xff]
    %v319 = vld [vmem:[#allocation4 + $0x100] sm:$0xff]
    %v320 = vld [vmem:[#allocation4 + $0x108] sm:$0xff]
    %v321 = vld [vmem:[#allocation4 + $0x110] sm:$0xff]
    %v322 = vld [vmem:[#allocation4 + $0x118] sm:$0xff]
    %v323 = vld [vmem:[#allocation4 + $0x120] sm:$0xff]
    %v324 = vld [vmem:[#allocation4 + $0x128] sm:$0xff]
    %v325 = vld [vmem:[#allocation4 + $0x130] sm:$0xff]
    %v326 = vld [vmem:[#allocation4 + $0x138] sm:$0xff]
    %v327 = vld [vmem:[#allocation4 + $0x140] sm:$0xff]
    %v328 = vld [vmem:[#allocation4 + $0x148] sm:$0xff]
    %v329 = vld [vmem:[#allocation4 + $0x150] sm:$0xff]
    %v330 = vld [vmem:[#allocation4 + $0x158] sm:$0xff]
    %v331 = vld [vmem:[#allocation4 + $0x160] sm:$0xff]
    %v332 = vld [vmem:[#allocation4 + $0x168] sm:$0xff]
    %v333 = vld [vmem:[#allocation4 + $0x170] sm:$0xff]
    %v334 = vld [vmem:[#allocation4 + $0x178] sm:$0xff]
    %335 = vmatprep.subr.mxu0 0.0
    %336 = vmatpush1.msra.mxu0 %v287
    %337 = vmatprep.subr.mxu0 0.0
    %338 = vmatpush1.msra.mxu0 %v288
    %339 = vmatprep.subr.mxu0 0.0
    %340 = vmatpush1.msra.mxu0 %v289
    %341 = vmatprep.subr.mxu0 0.0
    %342 = vmatpush1.msra.mxu0 %v290
    %343 = vmatprep.subr.mxu0 0.0
    %344 = vmatpush1.msra.mxu0 %v291
    %345 = vmatprep.subr.mxu0 0.0
    %346 = vmatpush1.msra.mxu0 %v292
    %347 = vmatprep.subr.mxu0 0.0
    %348 = vmatpush1.msra.mxu0 %v293
    %349 = vmatprep.subr.mxu0 0.0
    %350 = vmatpush1.msra.mxu0 %v294
    %351 = vmatprep.subr.mxu0 0.0
    %352 = vmatpush1.msra.mxu0 %v295
    %353 = vmatprep.subr.mxu0 0.0
    %354 = vmatpush1.msra.mxu0 %v296
    %355 = vmatprep.subr.mxu0 0.0
    %356 = vmatpush1.msra.mxu0 %v297
    %357 = vmatprep.subr.mxu0 0.0
    %358 = vmatpush1.msra.mxu0 %v298
    %359 = vmatprep.subr.mxu0 0.0
    %360 = vmatpush1.msra.mxu0 %v299
    %361 = vmatprep.subr.mxu0 0.0
    %362 = vmatpush1.msra.mxu0 %v300
    %363 = vmatprep.subr.mxu0 0.0
    %364 = vmatpush1.msra.mxu0 %v301
    %365 = vmatprep.subr.mxu0 0.0
    %366 = vmatpush1.msra.mxu0 %v302
    %367 = vmatprep.subr.mxu0 0.0
    %368 = vmatpush1.msra.mxu0 %v303
    %369 = vmatprep.subr.mxu0 0.0
    %370 = vmatpush1.msra.mxu0 %v304
    %371 = vmatprep.subr.mxu0 0.0
    %372 = vmatpush1.msra.mxu0 %v305
    %373 = vmatprep.subr.mxu0 0.0
    %374 = vmatpush1.msra.mxu0 %v306
    %375 = vmatprep.subr.mxu0 0.0
    %376 = vmatpush1.msra.mxu0 %v307
    %377 = vmatprep.subr.mxu0 0.0
    %378 = vmatpush1.msra.mxu0 %v308
    %379 = vmatprep.subr.mxu0 0.0
    %380 = vmatpush1.msra.mxu0 %v309
    %381 = vmatprep.subr.mxu0 0.0
    %382 = vmatpush1.msra.mxu0 %v310
    %383 = vmatprep.subr.mxu0 0.0
    %384 = vmatpush1.msra.mxu0 %v311
    %385 = vmatprep.subr.mxu0 0.0
    %386 = vmatpush1.msra.mxu0 %v312
    %387 = vmatprep.subr.mxu0 0.0
    %388 = vmatpush1.msra.mxu0 %v313
    %389 = vmatprep.subr.mxu0 0.0
    %390 = vmatpush1.msra.mxu0 %v314
    %391 = vmatprep.subr.mxu0 0.0
    %392 = vmatpush1.msra.mxu0 %v315
    %393 = vmatprep.subr.mxu0 0.0
    %394 = vmatpush1.msra.mxu0 %v316
    %395 = vmatprep.subr.mxu0 0.0
    %396 = vmatpush1.msra.mxu0 %v317
    %397 = vmatprep.subr.mxu0 0.0
    %398 = vmatpush1.msra.mxu0 %v318
    %399 = vmatprep.mubr.f32.mxu0 %v285
    %400 = vmatmul.mubr.f32.gmra.mrb[0].mxu0 %v284
    %v401 = vpop.f32.mrb[0].mxu0
    %v402 = vadd.f32 0.0, %v401
    %v403 = vpop.f32.mrb[0].mxu0
    %404 = vdwg.mxu0
    %405 = vmatprep.subr.mxu0 0.0
    %406 = vmatpush1.msra.mxu0 %v319
    %407 = vmatprep.subr.mxu0 0.0
    %408 = vmatpush1.msra.mxu0 %v320
    %409 = vmatprep.subr.mxu0 0.0
    %410 = vmatpush1.msra.mxu0 %v321
    %411 = vmatprep.subr.mxu0 0.0
    %412 = vmatpush1.msra.mxu0 %v322
    %413 = vmatprep.subr.mxu0 0.0
    %414 = vmatpush1.msra.mxu0 %v323
    %415 = vmatprep.subr.mxu0 0.0
    %416 = vmatpush1.msra.mxu0 %v324
    %417 = vmatprep.subr.mxu0 0.0
    %418 = vmatpush1.msra.mxu0 %v325
    %419 = vmatprep.subr.mxu0 0.0
    %420 = vmatpush1.msra.mxu0 %v326
    %421 = vmatprep.subr.mxu0 0.0
    %422 = vmatpush1.msra.mxu0 %v327
    %423 = vmatprep.subr.mxu0 0.0
    %424 = vmatpush1.msra.mxu0 %v328
    %425 = vmatprep.subr.mxu0 0.0
    %426 = vmatpush1.msra.mxu0 %v329
    %427 = vmatprep.subr.mxu0 0.0
    %428 = vmatpush1.msra.mxu0 %v330
    %429 = vmatprep.subr.mxu0 0.0
    %430 = vmatpush1.msra.mxu0 %v331
    %431 = vmatprep.subr.mxu0 0.0
    %432 = vmatpush1.msra.mxu0 %v332
    %433 = vmatprep.subr.mxu0 0.0
    %434 = vmatpush1.msra.mxu0 %v333
    %435 = vmatprep.subr.mxu0 0.0
    %436 = vmatpush1.msra.mxu0 %v334
    %437 = vmatprep.subr.mxu0 0.0
    %438 = vmatpush1.msra.mxu0 0.0
    %439 = vmatprep.subr.mxu0 0.0
    %440 = vmatpush1.msra.mxu0 0.0
    %441 = vmatprep.subr.mxu0 0.0
    %442 = vmatpush1.msra.mxu0 0.0
    %443 = vmatprep.subr.mxu0 0.0
    %444 = vmatpush1.msra.mxu0 0.0
    %445 = vmatprep.subr.mxu0 0.0
    %446 = vmatpush1.msra.mxu0 0.0
    %447 = vmatprep.subr.mxu0 0.0
    %448 = vmatpush1.msra.mxu0 0.0
    %449 = vmatprep.subr.mxu0 0.0
    %450 = vmatpush1.msra.mxu0 0.0
    %451 = vmatprep.subr.mxu0 0.0
    %452 = vmatpush1.msra.mxu0 0.0
    %453 = vmatprep.subr.mxu0 0.0
    %454 = vmatpush1.msra.mxu0 0.0
    %455 = vmatprep.subr.mxu0 0.0
    %456 = vmatpush1.msra.mxu0 0.0
    %457 = vmatprep.subr.mxu0 0.0
    %458 = vmatpush1.msra.mxu0 0.0
    %459 = vmatprep.subr.mxu0 0.0
    %460 = vmatpush1.msra.mxu0 0.0
    %461 = vmatprep.subr.mxu0 0.0
    %462 = vmatpush1.msra.mxu0 0.0
    %463 = vmatprep.subr.mxu0 0.0
    %464 = vmatpush1.msra.mxu0 0.0
    %465 = vmatprep.subr.mxu0 0.0
    %466 = vmatpush1.msra.mxu0 0.0
    %467 = vmatprep.subr.mxu0 0.0
    %468 = vmatpush1.msra.mxu0 0.0
    %469 = vmatprep.mubr.f32.mxu0 0.0
    %470 = vmatmul.mubr.f32.gmra.mrb[0].mxu0 %v286
    %v471 = vpop.f32.mrb[0].mxu0
    %v472 = vadd.f32 %v402, %v471
    %v473 = vpop.f32.mrb[0].mxu0
    %474 = vdwg.mxu0
    %v475 = vmax.f32 %v472, 0.0
    %v476 = vld [vmem:[%s3] sm:$0xff]
    %v477 = vld [vmem:[%s3 + $0x10] sm:$0xff]
    %v478 = vld [vmem:[%s3 + $0x20] sm:$0xff]
    %v479 = vld [vmem:[%s3 + $0x30] sm:$0xff]
    %v480 = vld [vmem:[%s3 + $0x40] sm:$0xff]
    %v481 = vld [vmem:[%s3 + $0x50] sm:$0xff]
    %v482 = vld [vmem:[%s3 + $0x60] sm:$0xff]
    %v483 = vld [vmem:[%s3 + $0x70] sm:$0xff]
    %v484 = vld [vmem:[%s3 + $0x80] sm:$0xff]
    %v485 = vld [vmem:[%s3 + $0x90] sm:$0xff]
    %v486 = vld [vmem:[%s3 + $0xa0] sm:$0xff]
    %v487 = vld [vmem:[%s3 + $0xb0] sm:$0xff]
    %v488 = vld [vmem:[%s3 + $0xc0] sm:$0xff]
    %v489 = vld [vmem:[%s3 + $0xd0] sm:$0xff]
    %v490 = vld [vmem:[%s3 + $0xe0] sm:$0xff]
    %v491 = vld [vmem:[%s3 + $0xf0] sm:$0xff]
    %492 = vmatprep.subr.mxu0 0.0
    %493 = vmatpush1.msra.mxu0 %v476
    %494 = vmatprep.subr.mxu0 0.0
    %495 = vmatpush1.msra.mxu0 %v477
    %496 = vmatprep.subr.mxu0 0.0
    %497 = vmatpush1.msra.mxu0 %v478
    %498 = vmatprep.subr.mxu0 0.0
    %499 = vmatpush1.msra.mxu0 %v479
    %500 = vmatprep.subr.mxu0 0.0
    %501 = vmatpush1.msra.mxu0 %v480
    %502 = vmatprep.subr.mxu0 0.0
    %503 = vmatpush1.msra.mxu0 %v481
    %504 = vmatprep.subr.mxu0 0.0
    %505 = vmatpush1.msra.mxu0 %v482
    %506 = vmatprep.subr.mxu0 0.0
    %507 = vmatpush1.msra.mxu0 %v483
    %508 = vmatprep.subr.mxu0 0.0
    %509 = vmatpush1.msra.mxu0 %v484
    %510 = vmatprep.subr.mxu0 0.0
    %511 = vmatpush1.msra.mxu0 %v485
    %512 = vmatprep.subr.mxu0 0.0
    %513 = vmatpush1.msra.mxu0 %v486
    %514 = vmatprep.subr.mxu0 0.0
    %515 = vmatpush1.msra.mxu0 %v487
    %516 = vmatprep.subr.mxu0 0.0
    %517 = vmatpush1.msra.mxu0 %v488
    %518 = vmatprep.subr.mxu0 0.0
    %519 = vmatpush1.msra.mxu0 %v489
    %520 = vmatprep.subr.mxu0 0.0
    %521 = vmatpush1.msra.mxu0 %v490
    %522 = vmatprep.subr.mxu0 0.0
    %523 = vmatpush1.msra.mxu0 %v491
    %524 = vmatprep.subr.mxu0 0.0
    %525 = vmatpush1.msra.mxu0 0.0
    %526 = vmatprep.subr.mxu0 0.0
    %527 = vmatpush1.msra.mxu0 0.0
    %528 = vmatprep.subr.mxu0 0.0
    %529 = vmatpush1.msra.mxu0 0.0
    %530 = vmatprep.subr.mxu0 0.0
    %531 = vmatpush1.msra.mxu0 0.0
    %532 = vmatprep.subr.mxu0 0.0
    %533 = vmatpush1.msra.mxu0 0.0
    %534 = vmatprep.subr.mxu0 0.0
    %535 = vmatpush1.msra.mxu0 0.0
    %536 = vmatprep.subr.mxu0 0.0
    %537 = vmatpush1.msra.mxu0 0.0
    %538 = vmatprep.subr.mxu0 0.0
    %539 = vmatpush1.msra.mxu0 0.0
    %540 = vmatprep.subr.mxu0 0.0
    %541 = vmatpush1.msra.mxu0 0.0
    %542 = vmatprep.subr.mxu0 0.0
    %543 = vmatpush1.msra.mxu0 0.0
    %544 = vmatprep.subr.mxu0 0.0
    %545 = vmatpush1.msra.mxu0 0.0
    %546 = vmatprep.subr.mxu0 0.0
    %547 = vmatpush1.msra.mxu0 0.0
    %548 = vmatprep.subr.mxu0 0.0
    %549 = vmatpush1.msra.mxu0 0.0
    %550 = vmatprep.subr.mxu0 0.0
    %551 = vmatpush1.msra.mxu0 0.0
    %552 = vmatprep.subr.mxu0 0.0
    %553 = vmatpush1.msra.mxu0 0.0
    %554 = vmatprep.subr.mxu0 0.0
    %555 = vmatpush1.msra.mxu0 0.0
    %556 = vmatprep.mubr.f32.mxu0 0.0
    %557 = vmatmul.mubr.f32.gmra.mrb[0].mxu0 %v475
    %v558 = vpop.f32.mrb[0].mxu0
    %v559 = vadd.f32 0.0, %v558
    %v560 = vpop.f32.mrb[0].mxu0
    %561 = vdwg.mxu0
    %v562 = vmax.f32 %v559, 0.0
    %v563 = vld [vmem:[%s3 + $0x8] sm:$0xff]
    %v564 = vld [vmem:[%s3 + $0x18] sm:$0xff]
    %v565 = vld [vmem:[%s3 + $0x28] sm:$0xff]
    %v566 = vld [vmem:[%s3 + $0x38] sm:$0xff]
    %v567 = vld [vmem:[%s3 + $0x48] sm:$0xff]
    %v568 = vld [vmem:[%s3 + $0x58] sm:$0xff]
    %v569 = vld [vmem:[%s3 + $0x68] sm:$0xff]
    %v570 = vld [vmem:[%s3 + $0x78] sm:$0xff]
    %v571 = vld [vmem:[%s3 + $0x88] sm:$0xff]
    %v572 = vld [vmem:[%s3 + $0x98] sm:$0xff]
    %v573 = vld [vmem:[%s3 + $0xa8] sm:$0xff]
    %v574 = vld [vmem:[%s3 + $0xb8] sm:$0xff]
    %v575 = vld [vmem:[%s3 + $0xc8] sm:$0xff]
    %v576 = vld [vmem:[%s3 + $0xd8] sm:$0xff]
    %v577 = vld [vmem:[%s3 + $0xe8] sm:$0xff]
    %v578 = vld [vmem:[%s3 + $0xf8] sm:$0xff]
    %579 = vmatprep.subr.mxu0 0.0
    %580 = vmatpush1.msra.mxu0 %v563
    %581 = vmatprep.subr.mxu0 0.0
    %582 = vmatpush1.msra.mxu0 %v564
    %583 = vmatprep.subr.mxu0 0.0
    %584 = vmatpush1.msra.mxu0 %v565
    %585 = vmatprep.subr.mxu0 0.0
    %586 = vmatpush1.msra.mxu0 %v566
    %587 = vmatprep.subr.mxu0 0.0
    %588 = vmatpush1.msra.mxu0 %v567
    %589 = vmatprep.subr.mxu0 0.0
    %590 = vmatpush1.msra.mxu0 %v568
    %591 = vmatprep.subr.mxu0 0.0
    %592 = vmatpush1.msra.mxu0 %v569
    %593 = vmatprep.subr.mxu0 0.0
    %594 = vmatpush1.msra.mxu0 %v570
    %595 = vmatprep.subr.mxu0 0.0
    %596 = vmatpush1.msra.mxu0 %v571
    %597 = vmatprep.subr.mxu0 0.0
    %598 = vmatpush1.msra.mxu0 %v572
    %599 = vmatprep.subr.mxu0 0.0
    %600 = vmatpush1.msra.mxu0 %v573
    %601 = vmatprep.subr.mxu0 0.0
    %602 = vmatpush1.msra.mxu0 %v574
    %603 = vmatprep.subr.mxu0 0.0
    %604 = vmatpush1.msra.mxu0 %v575
    %605 = vmatprep.subr.mxu0 0.0
    %606 = vmatpush1.msra.mxu0 %v576
    %607 = vmatprep.subr.mxu0 0.0
    %608 = vmatpush1.msra.mxu0 %v577
    %609 = vmatprep.subr.mxu0 0.0
    %610 = vmatpush1.msra.mxu0 %v578
    %611 = vmatprep.subr.mxu0 0.0
    %612 = vmatpush1.msra.mxu0 0.0
    %613 = vmatprep.subr.mxu0 0.0
    %614 = vmatpush1.msra.mxu0 0.0
    %615 = vmatprep.subr.mxu0 0.0
    %616 = vmatpush1.msra.mxu0 0.0
    %617 = vmatprep.subr.mxu0 0.0
    %618 = vmatpush1.msra.mxu0 0.0
    %619 = vmatprep.subr.mxu0 0.0
    %620 = vmatpush1.msra.mxu0 0.0
    %621 = vmatprep.subr.mxu0 0.0
    %622 = vmatpush1.msra.mxu0 0.0
    %623 = vmatprep.subr.mxu0 0.0
    %624 = vmatpush1.msra.mxu0 0.0
    %625 = vmatprep.subr.mxu0 0.0
    %626 = vmatpush1.msra.mxu0 0.0
    %627 = vmatprep.subr.mxu0 0.0
    %628 = vmatpush1.msra.mxu0 0.0
    %629 = vmatprep.subr.mxu0 0.0
    %630 = vmatpush1.msra.mxu0 0.0
    %631 = vmatprep.subr.mxu0 0.0
    %632 = vmatpush1.msra.mxu0 0.0
    %633 = vmatprep.subr.mxu0 0.0
    %634 = vmatpush1.msra.mxu0 0.0
    %635 = vmatprep.subr.mxu0 0.0
    %636 = vmatpush1.msra.mxu0 0.0
    %637 = vmatprep.subr.mxu0 0.0
    %638 = vmatpush1.msra.mxu0 0.0
    %639 = vmatprep.subr.mxu0 0.0
    %640 = vmatpush1.msra.mxu0 0.0
    %641 = vmatprep.subr.mxu0 0.0
    %642 = vmatpush1.msra.mxu0 0.0
    %643 = vmatprep.mubr.f32.mxu0 0.0
    %644 = vmatmul.mubr.f32.gmra.mrb[0].mxu0 %v562
    %v645 = vpop.f32.mrb[0].mxu0
    %v646 = vadd.f32 0.0, %v645
    %v647 = vpop.f32.mrb[0].mxu0
    %648 = vdwg.mxu0
    %649 = vst [vmem:[%s4] sm:$0xff] %v646
    // Predicated region
    $region26: #{net_forward.1} parent=1 // pred_check
      _
    $region27: #{net_forward.1} parent=1 // pred_check_branch
      %651 = sbr.rel (0) target = $region29
    $region28: #{net_forward.1} parent=1 // pred_region
      _
    $region29: #{net_forward.1} parent=1 // pred_fallthru
      _
    // Predicated region
    $region30: #{net_forward.1} parent=1 // pred_check
      _
    $region31: #{net_forward.1} parent=1 // pred_check_branch
      %653 = sbr.rel (0) target = $region33
    $region32: #{net_forward.1} parent=1 // pred_region
      _
    $region33: #{net_forward.1} parent=1 // pred_fallthru
      _
    %654 = vsyncpa [#allocation3], 1
    %655 = vsyncpa [#allocation5], 1

</llo_original>
